<compile_context>
chip_gen: v5e
topology: v5e:2x2
jax: 0.10.0
libtpu: 0.0.40
codegen_flags: <defaults>
</compile_context>

<pallas_src>
import numpy as np
import jax
import jax.numpy as jnp
from jax.experimental import pallas as pl
from jax.experimental.pallas import tpu as pltpu

POOL_SIZES = [1, 2, 3, 6]
BN_EPS = 1e-5


# ---------------------------------------------------------------------------
# Static helper matrices (exact PyTorch semantics).
# ---------------------------------------------------------------------------
def _adaptive_pool_matrix(in_size, out_size):
    """(out_size, in_size) matrix implementing AdaptiveAvgPool1d exactly."""
    m = np.zeros((out_size, in_size), dtype=np.float64)
    for i in range(out_size):
        start = (i * in_size) // out_size
        end = -((-(i + 1) * in_size) // out_size)  # ceil((i+1)*in/out)
        m[i, start:end] = 1.0 / (end - start)
    return m


def _bilinear_up_matrix(out_size, in_size):
    """(out_size, in_size) 1-D linear interpolation, align_corners=True."""
    m = np.zeros((out_size, in_size), dtype=np.float64)
    for r in range(out_size):
        if in_size == 1 or out_size == 1:
            src = 0.0
        else:
            src = r * (in_size - 1) / (out_size - 1)
        i0 = int(np.floor(src))
        i1 = min(i0 + 1, in_size - 1)
        frac = src - i0
        m[r, i0] += 1.0 - frac
        m[r, i1] += frac
    return m


def _round_up(x, m):
    return ((x + m - 1) // m) * m


def _pick_cin_tile(cin, max_tile=512):
    """Cin reduction tile: whole Cin if small, else a multiple-of-128 divisor."""
    if cin <= max_tile:
        return cin
    for t in range(max_tile, 0, -128):
        if t % 128 == 0 and cin % t == 0:
            return t
    return cin  # fallback: single reduction step


# ---------------------------------------------------------------------------
# Fused Pallas kernel: all branches, pool -> conv(+BN scale) -> shift/ReLU/mask
#                      -> bilinear upsample, accumulated over Cin tiles.
# ---------------------------------------------------------------------------
def _ppm_fused_kernel(x_ref, poolT_ref, wT_ref, shift_ref, mask_ref, upT_ref,
                      o_ref, acc_ref):
    k = pl.program_id(1)

    @pl.when(k == 0)
    def _():
        acc_ref[...] = jnp.zeros_like(acc_ref)

    x = x_ref[0]                                                    # (tc, HW)
    # adaptive avg-pool for all branches at once: (tc, S2p)
    pooled = jnp.dot(x, poolT_ref[...], preferred_element_type=jnp.float32)
    # 1x1 conv (BN gamma/sqrt(var+eps) folded into weights), stacked branches
    acc_ref[...] += jnp.dot(wT_ref[...], pooled.astype(wT_ref.dtype),
                            preferred_element_type=jnp.float32)     # (Ctot, S2p)

    @pl.when(k == pl.num_programs(1) - 1)
    def _():
        # BN shift + ReLU; mask ties each branch's rows to its own pooled cols
        feat = jnp.maximum(acc_ref[...] + shift_ref[...], 0.0) * mask_ref[...]
        # bilinear upsample (align_corners=True) for all branches: (Ctot, HW)
        o_ref[0] = jnp.dot(feat.astype(upT_ref.dtype), upT_ref[...],
                           preferred_element_type=jnp.float32).astype(o_ref.dtype)


# ---------------------------------------------------------------------------
# Parameters (deterministic, synthetic) and plan / forward wrappers
# ---------------------------------------------------------------------------
def init_ppm_params(key, in_channels, pool_sizes=POOL_SIZES):
    out_channels = in_channels // len(pool_sizes)
    params = []
    for i, _ in enumerate(pool_sizes):
        kw, kg, kb = jax.random.split(jax.random.fold_in(key, i), 3)
        w = jax.random.normal(kw, (in_channels, out_channels), jnp.float32) * 0.1
        gamma = jax.random.uniform(kg, (out_channels,), jnp.float32, 0.5, 1.5)
        beta = jax.random.normal(kb, (out_channels,), jnp.float32) * 0.1
        # TODO(synk): training-mode BatchNorm (batch statistics) not implemented;
        # eval-mode BN with running_mean=0, running_var=1 folded into scale/shift.
        scale = gamma / jnp.sqrt(1.0 + BN_EPS)
        shift = beta
        params.append({"w": w, "scale": scale, "shift": shift})
    return params


def build_ppm_plan(params, H, W, pool_sizes=POOL_SIZES, compute_dtype=jnp.bfloat16):
    """Precompute stacked/padded pooling, upsample, conv and mask tensors."""
    cin, cout = params[0]["w"].shape
    n_br = len(pool_sizes)
    ctot = n_br * cout
    hw = H * W
    s2_total = sum(s * s for s in pool_sizes)
    s2p = max(64, _round_up(s2_total, 8))            # pad stacked pooled dim

    poolT = np.zeros((hw, s2p), dtype=np.float64)
    upT = np.zeros((s2p, hw), dtype=np.float64)
    mask = np.zeros((ctot, s2p), dtype=np.float32)
    wT = np.zeros((ctot, cin), dtype=np.float32)
    shift = np.zeros((ctot, 1), dtype=np.float32)

    off = 0
    for b, s in enumerate(pool_sizes):
        Ph = _adaptive_pool_matrix(H, s)
        Pw = _adaptive_pool_matrix(W, s)
        Uh = _bilinear_up_matrix(H, s)
        Uw = _bilinear_up_matrix(W, s)
        poolT[:, off:off + s * s] = np.kron(Ph, Pw).T          # (HW, s*s)
        upT[off:off + s * s, :] = np.kron(Uh, Uw).T            # (s*s, HW)
        w = np.asarray(params[b]["w"], np.float32)             # (Cin, Cout)
        sc = np.asarray(params[b]["scale"], np.float32)        # (Cout,)
        wT[b * cout:(b + 1) * cout, :] = (w * sc[None, :]).T   # BN scale folded in
        shift[b * cout:(b + 1) * cout, 0] = np.asarray(params[b]["shift"], np.float32)
        mask[b * cout:(b + 1) * cout, off:off + s * s] = 1.0
        off += s * s

    return dict(
        H=H, W=W, hw=hw, cin=cin, ctot=ctot, s2p=s2p, compute_dtype=compute_dtype,
        poolT=jnp.asarray(poolT, compute_dtype),
        upT=jnp.asarray(upT, compute_dtype),
        wT=jnp.asarray(wT, compute_dtype),
        shift=jnp.asarray(shift, jnp.float32),
        mask=jnp.asarray(mask, jnp.float32),
    )


def pyramid_pooling_forward(x_nchw, plan):
    B, C, H, W = x_nchw.shape
    assert C == plan["cin"] and H == plan["H"] and W == plan["W"]
    hw, ctot, s2p = plan["hw"], plan["ctot"], plan["s2p"]
    cdt = plan["compute_dtype"]

    # NCHW flattens directly to (B, C, HW): no transpose round-trips.
    x_chw = x_nchw.reshape(B, C, hw).astype(cdt)

    tc = _pick_cin_tile(C)
    kt = C // tc

    branches = pl.pallas_call(
        _ppm_fused_kernel,
        out_shape=jax.ShapeDtypeStruct((B, ctot, hw), jnp.float32),
        grid_spec=pltpu.PrefetchScalarGridSpec(
            num_scalar_prefetch=0,
            grid=(B, kt),
            in_specs=[
                pl.BlockSpec((1, tc, hw), lambda b, k: (b, k, 0)),   # x tile
                pl.BlockSpec((hw, s2p), lambda b, k: (0, 0)),        # stacked Pool^T
                pl.BlockSpec((ctot, tc), lambda b, k: (0, k)),       # stacked conv W^T
                pl.BlockSpec((ctot, 1), lambda b, k: (0, 0)),        # BN shift
                pl.BlockSpec((ctot, s2p), lambda b, k: (0, 0)),      # branch mask
                pl.BlockSpec((s2p, hw), lambda b, k: (0, 0)),        # stacked Up^T
            ],
            out_specs=pl.BlockSpec((1, ctot, hw), lambda b, k: (b, 0, 0)),
            scratch_shapes=[pltpu.VMEM((ctot, s2p), jnp.float32)],
        ),
        compiler_params=pltpu.CompilerParams(
            dimension_semantics=("parallel", "arbitrary"),
            vmem_limit_bytes=48 * 1024 * 1024,
        ),
    )(x_chw, plan["poolT"], plan["wT"], plan["shift"], plan["mask"], plan["upT"])

    y = branches.reshape(B, ctot, H, W)
    return jnp.concatenate([x_nchw, y], axis=1)


# ---------------------------------------------------------------------------
# Pure numpy reference (loop-based, matches PyTorch semantics) for verification
# ---------------------------------------------------------------------------
def _ref_adaptive_avg_pool(x, s):
    B, C, H, W = x.shape
    out = np.zeros((B, C, s, s), dtype=np.float64)
    for i in range(s):
        h0 = (i * H) // s
        h1 = -((-(i + 1) * H) // s)
        for j in range(s):
            w0 = (j * W) // s
            w1 = -((-(j + 1) * W) // s)
            out[:, :, i, j] = x[:, :, h0:h1, w0:w1].mean(axis=(2, 3))
    return out


def _ref_bilinear_up(f, H, W):
    B, C, s, _ = f.shape
    out = np.zeros((B, C, H, W), dtype=np.float64)
    for r in range(H):
        if s == 1:
            i0, i1, fr = 0, 0, 0.0
        else:
            sr = r * (s - 1) / (H - 1)
            i0 = int(np.floor(sr))
            i1 = min(i0 + 1, s - 1)
            fr = sr - i0
        for c in range(W):
            if s == 1:
                j0, j1, fc = 0, 0, 0.0
            else:
                sc = c * (s - 1) / (W - 1)
                j0 = int(np.floor(sc))
                j1 = min(j0 + 1, s - 1)
                fc = sc - j0
            out[:, :, r, c] = ((1 - fr) * (1 - fc) * f[:, :, i0, j0]
                               + (1 - fr) * fc * f[:, :, i0, j1]
                               + fr * (1 - fc) * f[:, :, i1, j0]
                               + fr * fc * f[:, :, i1, j1])
    return out


def reference_forward(x_nchw, params, pool_sizes=POOL_SIZES):
    x = np.asarray(x_nchw, dtype=np.float64)
    outputs = [x]
    for s, p in zip(pool_sizes, params):
        pooled = _ref_adaptive_avg_pool(x, s)                       # (B,C,s,s)
        w = np.asarray(p["w"], dtype=np.float64)                    # (Cin,Cout)
        feat = np.einsum("bchw,co->bohw", pooled, w)
        scale = np.asarray(p["scale"], dtype=np.float64).reshape(1, -1, 1, 1)
        shift = np.asarray(p["shift"], dtype=np.float64).reshape(1, -1, 1, 1)
        feat = np.maximum(feat * scale + shift, 0.0)
        up = _ref_bilinear_up(feat, x.shape[2], x.shape[3])
        outputs.append(up)
    return np.concatenate(outputs, axis=1)


# ---------------------------------------------------------------------------
if __name__ == "__main__":
    key = jax.random.PRNGKey(0)
    kx, kp = jax.random.split(key)

    B, C, H, W = 2, 8, 16, 16
    x = jax.random.normal(kx, (B, C, H, W), dtype=jnp.float32)
    params = init_ppm_params(kp, C, POOL_SIZES)

    ref = reference_forward(x, params, POOL_SIZES)
    expected_channels = C + len(POOL_SIZES) * (C // len(POOL_SIZES))

    # 1) exact-math check: f32 matmul inputs
    plan_f32 = build_ppm_plan(params, H, W, POOL_SIZES, compute_dtype=jnp.float32)
    out_f32 = jax.block_until_ready(pyramid_pooling_forward(x, plan_f32))
    assert out_f32.shape == (B, expected_channels, H, W), out_f32.shape
    np.testing.assert_allclose(np.asarray(out_f32), ref, rtol=1e-4, atol=1e-5)

    # 2) fast path: bf16 matmul inputs, f32 accumulation / epilogue
    plan_bf16 = build_ppm_plan(params, H, W, POOL_SIZES, compute_dtype=jnp.bfloat16)
    out_bf16 = jax.block_until_ready(pyramid_pooling_forward(x, plan_bf16))
    assert out_bf16.shape == (B, expected_channels, H, W), out_bf16.shape
    np.testing.assert_allclose(np.asarray(out_bf16), ref, rtol=5e-2, atol=5e-2)

    print("KERNEL_OK")
</pallas_src>

<mosaic_0001>
module attributes {stable_mosaic.version = 11 : i64} {
  func.func @_ppm_fused_kernel(%arg0: i32, %arg1: i32, %arg2: memref<1x8x256xf32, #tpu.memory_space<vmem>>, %arg3: memref<256x64xf32, #tpu.memory_space<vmem>>, %arg4: memref<8x8xf32, #tpu.memory_space<vmem>>, %arg5: memref<8x1xf32, #tpu.memory_space<vmem>>, %arg6: memref<8x64xf32, #tpu.memory_space<vmem>>, %arg7: memref<64x256xf32, #tpu.memory_space<vmem>>, %arg8: memref<1x8x256xf32, #tpu.memory_space<vmem>>, %arg9: memref<8x64xf32, #tpu.memory_space<vmem>>) attributes {dimension_semantics = [#tpu.dimension_semantics<parallel>, #tpu.dimension_semantics<arbitrary>], iteration_bounds = array<i64: 2, 1>, scalar_prefetch = 0 : i64, scratch_operands = 1 : i64, tpu.core_type = #tpu.core_type<tc>, window_params = [{transform_indices = @transform_0, window_bounds = array<i64: 1, 8, 256>}, {pipeline_mode = #tpu.pipeline_mode<synchronous>, transform_indices = @transform_1, window_bounds = array<i64: 256, 64>}, {transform_indices = @transform_2, window_bounds = array<i64: 8, 8>}, {pipeline_mode = #tpu.pipeline_mode<synchronous>, transform_indices = @transform_3, window_bounds = array<i64: 8, 1>}, {pipeline_mode = #tpu.pipeline_mode<synchronous>, transform_indices = @transform_4, window_bounds = array<i64: 8, 64>}, {pipeline_mode = #tpu.pipeline_mode<synchronous>, transform_indices = @transform_5, window_bounds = array<i64: 64, 256>}, {transform_indices = @transform_6, window_bounds = array<i64: 1, 8, 256>}]} {
    %c0_i32 = arith.constant 0 : i32
    %0 = arith.cmpi eq, %arg1, %c0_i32 : i32
    %1 = arith.extui %0 : i1 to i32
    %c0_i32_0 = arith.constant 0 : i32
    %2 = arith.cmpi ne, %1, %c0_i32_0 : i32
    scf.if %2 {
      %cst_14 = arith.constant 0.000000e+00 : f32
      %15 = vector.broadcast %cst_14 : f32 to vector<8x64xf32>
      %c0_15 = arith.constant 0 : index
      %c0_16 = arith.constant 0 : index
      %16 = vector.load %arg9[%c0_15, %c0_16] : memref<8x64xf32, #tpu.memory_space<vmem>>, vector<8x64xf32>
      tpu.vector_store %arg9[%c0_15, %c0_16], %15 {strides = array<i32>} : memref<8x64xf32, #tpu.memory_space<vmem>>, vector<8x64xf32>,
    } else {
    }
    %c0 = arith.constant 0 : index
    %c0_1 = arith.constant 0 : index
    %c0_2 = arith.constant 0 : index
    %3 = vector.load %arg2[%c0, %c0_1, %c0_2] : memref<1x8x256xf32, #tpu.memory_space<vmem>>, vector<1x8x256xf32>
    %4 = vector.shape_cast %3 : vector<1x8x256xf32> to vector<8x256xf32>
    %c0_3 = arith.constant 0 : index
    %c0_4 = arith.constant 0 : index
    %5 = vector.load %arg3[%c0_3, %c0_4] : memref<256x64xf32, #tpu.memory_space<vmem>>, vector<256x64xf32>
    %cst = arith.constant dense<0.000000e+00> : vector<8x64xf32>
    %6 = tpu.matmul %4, %5, %cst {dimension_numbers = #tpu.dot_dimension_numbers<[1], [0], [0], [1], [0, 0, 1, 1], [], []>} : vector<8x256xf32>, vector<256x64xf32>, vector<8x64xf32> -> vector<8x64xf32>
    %c0_5 = arith.constant 0 : index
    %c0_6 = arith.constant 0 : index
    %7 = vector.load %arg9[%c0_5, %c0_6] : memref<8x64xf32, #tpu.memory_space<vmem>>, vector<8x64xf32>
    %c0_7 = arith.constant 0 : index
    %c0_8 = arith.constant 0 : index
    %8 = vector.load %arg4[%c0_7, %c0_8] : memref<8x8xf32, #tpu.memory_space<vmem>>, vector<8x8xf32>
    %cst_9 = arith.constant dense<0.000000e+00> : vector<8x64xf32>
    %9 = tpu.matmul %8, %6, %cst_9 {dimension_numbers = #tpu.dot_dimension_numbers<[1], [0], [0], [1], [0, 0, 1, 1], [], []>} : vector<8x8xf32>, vector<8x64xf32>, vector<8x64xf32> -> vector<8x64xf32>
    %10 = arith.addf %7, %9 : vector<8x64xf32>
    %c0_10 = arith.constant 0 : index
    %c0_11 = arith.constant 0 : index
    %11 = vector.load %arg9[%c0_10, %c0_11] : memref<8x64xf32, #tpu.memory_space<vmem>>, vector<8x64xf32>
    tpu.vector_store %arg9[%c0_10, %c0_11], %10 {strides = array<i32>} : memref<8x64xf32, #tpu.memory_space<vmem>>, vector<8x64xf32>,
    %c0_i32_12 = arith.constant 0 : i32
    %12 = arith.cmpi eq, %arg1, %c0_i32_12 : i32
    %13 = arith.extui %12 : i1 to i32
    %c0_i32_13 = arith.constant 0 : i32
    %14 = arith.cmpi ne, %13, %c0_i32_13 : i32
    scf.if %14 {
      %c0_14 = arith.constant 0 : index
      %c0_15 = arith.constant 0 : index
      %15 = vector.load %arg9[%c0_14, %c0_15] : memref<8x64xf32, #tpu.memory_space<vmem>>, vector<8x64xf32>
      %c0_16 = arith.constant 0 : index
      %c0_17 = arith.constant 0 : index
      %16 = vector.load %arg5[%c0_16, %c0_17] : memref<8x1xf32, #tpu.memory_space<vmem>>, vector<8x1xf32>
      %17 = vector.broadcast %16 : vector<8x1xf32> to vector<8x64xf32>
      %18 = arith.addf %15, %17 : vector<8x64xf32>
      %cst_18 = arith.constant 0.000000e+00 : f32
      %19 = vector.broadcast %cst_18 : f32 to vector<8x64xf32>
      %20 = arith.maximumf %18, %19 : vector<8x64xf32>
      %c0_19 = arith.constant 0 : index
      %c0_20 = arith.constant 0 : index
      %21 = vector.load %arg6[%c0_19, %c0_20] : memref<8x64xf32, #tpu.memory_space<vmem>>, vector<8x64xf32>
      %22 = arith.mulf %20, %21 : vector<8x64xf32>
      %c0_21 = arith.constant 0 : index
      %c0_22 = arith.constant 0 : index
      %23 = vector.load %arg7[%c0_21, %c0_22] : memref<64x256xf32, #tpu.memory_space<vmem>>, vector<64x256xf32>
      %cst_23 = arith.constant dense<0.000000e+00> : vector<8x256xf32>
      %24 = tpu.matmul %22, %23, %cst_23 {dimension_numbers = #tpu.dot_dimension_numbers<[1], [0], [0], [1], [0, 0, 1, 1], [], []>} : vector<8x64xf32>, vector<64x256xf32>, vector<8x256xf32> -> vector<8x256xf32>
      %c0_24 = arith.constant 0 : index
      %c0_25 = arith.constant 0 : index
      %c0_26 = arith.constant 0 : index
      %25 = vector.load %arg8[%c0_24, %c0_25, %c0_26] : memref<1x8x256xf32, #tpu.memory_space<vmem>>, vector<1x8x256xf32>
      %26 = vector.shape_cast %25 : vector<1x8x256xf32> to vector<8x256xf32>
      %27 = vector.shape_cast %24 : vector<8x256xf32> to vector<1x8x256xf32>
      tpu.vector_store %arg8[%c0_24, %c0_25, %c0_26], %27 {strides = array<i32>} : memref<1x8x256xf32, #tpu.memory_space<vmem>>, vector<1x8x256xf32>,
    } else {
    }
    return
  }
  func.func @transform_0(%arg0: i32, %arg1: i32) -> (i32, i32, i32) {
    %c0_i32 = arith.constant 0 : i32
    %c0_i32_0 = arith.constant 0 : i32
    return %arg0, %arg1, %c0_i32 : i32, i32, i32
  }
  func.func @transform_1(%arg0: i32, %arg1: i32) -> (i32, i32) {
    %c0_i32 = arith.constant 0 : i32
    %c0_i32_0 = arith.constant 0 : i32
    %c0_i32_1 = arith.constant 0 : i32
    return %c0_i32, %c0_i32_0 : i32, i32
  }
  func.func @transform_2(%arg0: i32, %arg1: i32) -> (i32, i32) {
    %c0_i32 = arith.constant 0 : i32
    %c0_i32_0 = arith.constant 0 : i32
    return %c0_i32, %arg1 : i32, i32
  }
  func.func @transform_3(%arg0: i32, %arg1: i32) -> (i32, i32) {
    %c0_i32 = arith.constant 0 : i32
    %c0_i32_0 = arith.constant 0 : i32
    %c0_i32_1 = arith.constant 0 : i32
    return %c0_i32, %c0_i32_0 : i32, i32
  }
  func.func @transform_4(%arg0: i32, %arg1: i32) -> (i32, i32) {
    %c0_i32 = arith.constant 0 : i32
    %c0_i32_0 = arith.constant 0 : i32
    %c0_i32_1 = arith.constant 0 : i32
    return %c0_i32, %c0_i32_0 : i32, i32
  }
  func.func @transform_5(%arg0: i32, %arg1: i32) -> (i32, i32) {
    %c0_i32 = arith.constant 0 : i32
    %c0_i32_0 = arith.constant 0 : i32
    %c0_i32_1 = arith.constant 0 : i32
    return %c0_i32, %c0_i32_0 : i32, i32
  }
  func.func @transform_6(%arg0: i32, %arg1: i32) -> (i32, i32, i32) {
    %c0_i32 = arith.constant 0 : i32
    %c0_i32_0 = arith.constant 0 : i32
    %c0_i32_1 = arith.constant 0 : i32
    return %arg0, %c0_i32, %c0_i32_0 : i32, i32, i32
  }
}

</mosaic_0001>

<llo_original>
// kernel: tpu_custom_call.1
$region0: #{tpu_custom_call.1}
  #allocation0 [shape = 'u32[]', space=smem, size = 0x4, offset = 0x4, fixed_abs, tag = 'smem constant byte address 0x4 - core index']
  #allocation1 [shape = 'u32[72,128]{1,0:T(1,128)}', space=vmem, size = 0x9000, scoped, tag = 'internal scratch']
  #allocation2 [shape = 'f32[8,64]{1,0:T(8,128)}', space=vmem, size = 0x1000, scoped, tag = 'scratch operand']
  %s0 = inlined_call_operand.vmem [shape: f32[2,8,256], index: 0, kind: input, shape index: {}]
  %s1 = inlined_call_operand.vmem [shape: f32[256,64], index: 1, kind: input, shape index: {}]
  %s2 = inlined_call_operand.vmem [shape: f32[8,8], index: 2, kind: input, shape index: {}]
  %s3 = inlined_call_operand.vmem [shape: f32[8,1], index: 3, kind: input, shape index: {}]
  %s4 = inlined_call_operand.vmem [shape: f32[8,64], index: 4, kind: input, shape index: {}]
  %s5 = inlined_call_operand.vmem [shape: f32[64,256], index: 5, kind: input, shape index: {}]
  %s6 = inlined_call_operand.hbm [shape: f32[2,8,256], index: 6, kind: output, shape index: {}]
  %s7 = sld [smem:[#allocation0]]
  $region65: #{tpu_custom_call.1} parent=0
    _
  %s9 = ssub.s32 1, %s7
  %s10 = scalar_select 0, %s9, %s7
  $region1: #{tpu_custom_call.1} parent=0
    #allocation3 [shape = 'u8[16384]{0}', space=vmem, size = 0x4000, scoped, tag = 'output window, operand 0']
    #allocation4 [shape = 's32[2]{0}', space=sflag, size = 0x8, scoped, tag = 'scoped memory for tpu_custom_call.1']
    %11 = vsyncpa [#allocation4], 0
    %s12 = scalar_lea.sflag [#allocation4], 1
    %13 = vsyncpa %s12, 0
    loop: start=0, step=1, limit=4
    $region2: #{tpu_custom_call.1} parent=1 // loop_pre_header
      _
    $region3: #{tpu_custom_call.1} parent=1 // loop_header
      %s15 = sphi 0, %s19
      %p16 = scmp.ge.s32.totalorder %s15, 4
      %s22 = sphi 0, %s34
      %s23 = sphi 0, %s30
      %s24 = sphi 0, %s22
      %s25 = sphi 0, %s23
      %s26 = sphi 0, %s24
      %s27 = sphi 0, %s25
      %s39 = sphi 0, %s41
      %s42 = sphi 0, %s39
      %s43 = sphi 0, %s42
      %s59 = sphi 0, %s43
      %s63 = sphi 0, %s63
      %s65 = sphi 0, %s63
      %s66 = sphi 0, %s65
      %s80 = sphi 0, %s66
      %s86 = sphi 0, %s88
      %s89 = sphi 0, %s86
      %s90 = sphi 0, %s89
      %s106 = sphi 0, %s90
      %s110 = sphi 0, %s110
      %s112 = sphi 0, %s110
      %s113 = sphi 0, %s112
      %s127 = sphi 0, %s113
      %s131 = sphi 0, %s131
      %s133 = sphi 0, %s131
      %s134 = sphi 0, %s133
      %s148 = sphi 0, %s134
      %s152 = sphi 0, %s152
      %s154 = sphi 0, %s152
      %s155 = sphi 0, %s154
      %s169 = sphi 0, %s155
      %s175 = sphi 0, %s177
      %s178 = sphi 0, %s175
      %s179 = sphi 0, %s178
      %s195 = sphi 0, %s179
    $region4: #{tpu_custom_call.1} parent=1 // loop_header_branch
      %18 = sbr.rel (%p16) target = $region8
    $region5: #{tpu_custom_call.1} parent=1 // loop_body
      %s20 = ssub.s32 %s15, 1
      %s21 = ssub.s32 %s15, 2
      %s28 = sadd.s32 1, %s23
      %p29 = scmp.ge.s32.totalorder %s28, 1
      %s30 = scalar_select %p29, 0, %s28
      %s31 = sadd.s32 1, %s22
      %s32 = scalar_select %p29, %s31, %s22
      %p33 = scmp.ge.s32.totalorder %s32, 2
      %s34 = scalar_select %p33, 0, %s32
      %s35 = ssub.s32 %s22, %s34
      %s36 = ssub.s32 %s23, %s30
      %s37 = sor.u32 %s35, %s36
      %p38 = scmp.eq.s32.totalorder %s37, 0
      %s40 = sadd.s32 %s39, 1
      %s41 = scalar_select %p38, %s39, %s40
      %p44 = pneg %p38
      %p45 = scmp.eq.s32.totalorder %s15, 1
      %p46 = por %p44, %p45
      %p47 = scmp.ne.s32.totalorder %s39, %s42
      %p48 = scmp.eq.s32.totalorder %s15, 0
      %p49 = por %p47, %p48
      %p50 = scmp.ne.s32.totalorder %s39, %s42
      %p51 = scmp.eq.s32.totalorder %s20, 1
      %p52 = por %p50, %p51
      %p53 = scmp.ne.s32.totalorder %s42, %s43
      %p54 = scmp.eq.s32.totalorder %s20, 0
      %p55 = por %p53, %p54
      %p56 = scmp.ne.s32.totalorder %s42, %s43
      %p57 = scmp.eq.s32.totalorder %s21, 1
      %p58 = por %p56, %p57
      %p60 = scmp.ne.s32.totalorder %s43, %s59
      %p61 = scmp.eq.s32.totalorder %s21, 0
      %p62 = por %p60, %p61
      %s64 = sadd.s32 %s63, 1
      %p67 = scmp.eq.s32.totalorder %s15, 1
      %p68 = scmp.ne.s32.totalorder %s63, %s65
      %p69 = scmp.eq.s32.totalorder %s15, 0
      %p70 = por %p68, %p69
      %p71 = scmp.ne.s32.totalorder %s63, %s65
      %p72 = scmp.eq.s32.totalorder %s20, 1
      %p73 = por %p71, %p72
      %p74 = scmp.ne.s32.totalorder %s65, %s66
      %p75 = scmp.eq.s32.totalorder %s20, 0
      %p76 = por %p74, %p75
      %p77 = scmp.ne.s32.totalorder %s65, %s66
      %p78 = scmp.eq.s32.totalorder %s21, 1
      %p79 = por %p77, %p78
      %p81 = scmp.ne.s32.totalorder %s66, %s80
      %p82 = scmp.eq.s32.totalorder %s21, 0
      %p83 = por %p81, %p82
      %s84 = ssub.s32 %s23, %s30
      %p85 = scmp.eq.s32.totalorder %s84, 0
      %s87 = sadd.s32 %s86, 1
      %s88 = scalar_select %p85, %s86, %s87
      %p91 = pneg %p85
      %p92 = scmp.eq.s32.totalorder %s15, 1
      %p93 = por %p91, %p92
      %p94 = scmp.ne.s32.totalorder %s86, %s89
      %p95 = scmp.eq.s32.totalorder %s15, 0
      %p96 = por %p94, %p95
      %p97 = scmp.ne.s32.totalorder %s86, %s89
      %p98 = scmp.eq.s32.totalorder %s20, 1
      %p99 = por %p97, %p98
      %p100 = scmp.ne.s32.totalorder %s89, %s90
      %p101 = scmp.eq.s32.totalorder %s20, 0
      %p102 = por %p100, %p101
      %p103 = scmp.ne.s32.totalorder %s89, %s90
      %p104 = scmp.eq.s32.totalorder %s21, 1
      %p105 = por %p103, %p104
      %p107 = scmp.ne.s32.totalorder %s90, %s106
      %p108 = scmp.eq.s32.totalorder %s21, 0
      %p109 = por %p107, %p108
      %s111 = sadd.s32 %s110, 1
      %p114 = scmp.eq.s32.totalorder %s15, 1
      %p115 = scmp.ne.s32.totalorder %s110, %s112
      %p116 = scmp.eq.s32.totalorder %s15, 0
      %p117 = por %p115, %p116
      %p118 = scmp.ne.s32.totalorder %s110, %s112
      %p119 = scmp.eq.s32.totalorder %s20, 1
      %p120 = por %p118, %p119
      %p121 = scmp.ne.s32.totalorder %s112, %s113
      %p122 = scmp.eq.s32.totalorder %s20, 0
      %p123 = por %p121, %p122
      %p124 = scmp.ne.s32.totalorder %s112, %s113
      %p125 = scmp.eq.s32.totalorder %s21, 1
      %p126 = por %p124, %p125
      %p128 = scmp.ne.s32.totalorder %s113, %s127
      %p129 = scmp.eq.s32.totalorder %s21, 0
      %p130 = por %p128, %p129
      %s132 = sadd.s32 %s131, 1
      %p135 = scmp.eq.s32.totalorder %s15, 1
      %p136 = scmp.ne.s32.totalorder %s131, %s133
      %p137 = scmp.eq.s32.totalorder %s15, 0
      %p138 = por %p136, %p137
      %p139 = scmp.ne.s32.totalorder %s131, %s133
      %p140 = scmp.eq.s32.totalorder %s20, 1
      %p141 = por %p139, %p140
      %p142 = scmp.ne.s32.totalorder %s133, %s134
      %p143 = scmp.eq.s32.totalorder %s20, 0
      %p144 = por %p142, %p143
      %p145 = scmp.ne.s32.totalorder %s133, %s134
      %p146 = scmp.eq.s32.totalorder %s21, 1
      %p147 = por %p145, %p146
      %p149 = scmp.ne.s32.totalorder %s134, %s148
      %p150 = scmp.eq.s32.totalorder %s21, 0
      %p151 = por %p149, %p150
      %s153 = sadd.s32 %s152, 1
      %p156 = scmp.eq.s32.totalorder %s15, 1
      %p157 = scmp.ne.s32.totalorder %s152, %s154
      %p158 = scmp.eq.s32.totalorder %s15, 0
      %p159 = por %p157, %p158
      %p160 = scmp.ne.s32.totalorder %s152, %s154
      %p161 = scmp.eq.s32.totalorder %s20, 1
      %p162 = por %p160, %p161
      %p163 = scmp.ne.s32.totalorder %s154, %s155
      %p164 = scmp.eq.s32.totalorder %s20, 0
      %p165 = por %p163, %p164
      %p166 = scmp.ne.s32.totalorder %s154, %s155
      %p167 = scmp.eq.s32.totalorder %s21, 1
      %p168 = por %p166, %p167
      %p170 = scmp.ne.s32.totalorder %s155, %s169
      %p171 = scmp.eq.s32.totalorder %s21, 0
      %p172 = por %p170, %p171
      %s173 = ssub.s32 %s22, %s34
      %p174 = scmp.eq.s32.totalorder %s173, 0
      %s176 = sadd.s32 %s175, 1
      %s177 = scalar_select %p174, %s175, %s176
      %p180 = pneg %p174
      %p181 = scmp.eq.s32.totalorder %s15, 1
      %p182 = por %p180, %p181
      %p183 = scmp.ne.s32.totalorder %s175, %s178
      %p184 = scmp.eq.s32.totalorder %s15, 0
      %p185 = por %p183, %p184
      %p186 = scmp.ne.s32.totalorder %s175, %s178
      %p187 = scmp.eq.s32.totalorder %s20, 1
      %p188 = por %p186, %p187
      %p189 = scmp.ne.s32.totalorder %s178, %s179
      %p190 = scmp.eq.s32.totalorder %s20, 0
      %p191 = por %p189, %p190
      %p192 = scmp.ne.s32.totalorder %s178, %s179
      %p193 = scmp.eq.s32.totalorder %s21, 1
      %p194 = por %p192, %p193
      %p196 = scmp.ne.s32.totalorder %s179, %s195
      %p197 = scmp.eq.s32.totalorder %s21, 0
      %p198 = por %p196, %p197
      %p199 = scmp.le.s32.totalorder 1, %s15
      %p200 = scmp.lt.s32.totalorder %s15, 3
      %p201 = pnand %p199, %p200
      %p202 = pneg %p201
      // Predicated region
      $region9: #{tpu_custom_call.1} parent=5 // pred_check
        _
      $region10: #{tpu_custom_call.1} parent=5 // pred_check_branch
        %204 = sbr.rel (%p201) target = $region12
      $region11: #{tpu_custom_call.1} parent=5 // pred_region
        %s205 = ssub.s32 %s15, 1
        // Predicated region
        $region13: #{tpu_custom_call.1} parent=11 // pred_check
          %p206 = pneg %p76
        $region14: #{tpu_custom_call.1} parent=11 // pred_check_branch
          %208 = sbr.rel (%p206) target = $region16
        $region15: #{tpu_custom_call.1} parent=11 // pred_region
          _
        $region16: #{tpu_custom_call.1} parent=11 // pred_fallthru
          _
        // Predicated region
        $region17: #{tpu_custom_call.1} parent=11 // pred_check
          %p209 = pneg %p102
        $region18: #{tpu_custom_call.1} parent=11 // pred_check_branch
          %211 = sbr.rel (%p209) target = $region20
        $region19: #{tpu_custom_call.1} parent=11 // pred_region
          %p212 = scmp.lt.s32.totalorder %s25, 0
          %s213 = scalar_select %p212, %s25, 0
          %s214 = smul.addr %s213, 8
          %s215 = scalar_lea.vmem %s2, %s214
        $region20: #{tpu_custom_call.1} parent=11 // pred_fallthru
          _
        // Predicated region
        $region21: #{tpu_custom_call.1} parent=11 // pred_check
          %p216 = pneg %p123
        $region22: #{tpu_custom_call.1} parent=11 // pred_check_branch
          %218 = sbr.rel (%p216) target = $region24
        $region23: #{tpu_custom_call.1} parent=11 // pred_region
          _
        $region24: #{tpu_custom_call.1} parent=11 // pred_fallthru
          _
        // Predicated region
        $region25: #{tpu_custom_call.1} parent=11 // pred_check
          %p219 = pneg %p144
        $region26: #{tpu_custom_call.1} parent=11 // pred_check_branch
          %221 = sbr.rel (%p219) target = $region28
        $region27: #{tpu_custom_call.1} parent=11 // pred_region
          _
        $region28: #{tpu_custom_call.1} parent=11 // pred_fallthru
          _
        // Predicated region
        $region29: #{tpu_custom_call.1} parent=11 // pred_check
          %p222 = pneg %p165
        $region30: #{tpu_custom_call.1} parent=11 // pred_check_branch
          %224 = sbr.rel (%p222) target = $region32
        $region31: #{tpu_custom_call.1} parent=11 // pred_region
          _
        $region32: #{tpu_custom_call.1} parent=11 // pred_fallthru
          _
      $region12: #{tpu_custom_call.1} parent=5 // pred_fallthru
        _
      %p225 = scmp.lt.s32.totalorder %s15, 2
      // Predicated region
      $region33: #{tpu_custom_call.1} parent=5 // pred_check
        %p226 = pneg %p225
      $region34: #{tpu_custom_call.1} parent=5 // pred_check_branch
        %228 = sbr.rel (%p226) target = $region36
      $region35: #{tpu_custom_call.1} parent=5 // pred_region
        // Predicated region
        $region37: #{tpu_custom_call.1} parent=35 // pred_check
          %p229 = pneg %p49
        $region38: #{tpu_custom_call.1} parent=35 // pred_check_branch
          %231 = sbr.rel (%p229) target = $region40
        $region39: #{tpu_custom_call.1} parent=35 // pred_region
          %p232 = scmp.lt.s32.totalorder %s22, 1
          %s233 = scalar_select %p232, %s22, 1
          %p234 = scmp.lt.s32.totalorder %s23, 0
          %s235 = scalar_select %p234, %s23, 0
          %s236 = smul.addr %s235, 2
          %s237 = smul.addr %s233, 2
          %s238 = sadd.s32 %s236, %s237
          %s239 = smul.addr %s238, 8
          %s240 = scalar_lea.vmem %s0, %s239
        $region40: #{tpu_custom_call.1} parent=35 // pred_fallthru
          _
      $region36: #{tpu_custom_call.1} parent=5 // pred_fallthru
        _
      %p241 = scmp.le.s32.totalorder 1, %s15
      %p242 = scmp.lt.s32.totalorder %s15, 3
      %p243 = pnand %p241, %p242
      %p244 = pneg %p243
      // Predicated region
      $region41: #{tpu_custom_call.1} parent=5 // pred_check
        _
      $region42: #{tpu_custom_call.1} parent=5 // pred_check_branch
        %246 = sbr.rel (%p243) target = $region44
      $region43: #{tpu_custom_call.1} parent=5 // pred_region
        %s247 = ssub.s32 %s15, 1
        %p248 = scmp.lt.s32.totalorder %s24, 1
        %s249 = scalar_select %p248, %s24, 1
        %p250 = scmp.lt.s32.totalorder %s25, 0
        %s251 = scalar_select %p250, %s25, 0
        %s252 = smul.addr %s251, 2
        %s253 = smul.addr %s249, 2
        %s254 = sadd.s32 %s252, %s253
        %s255 = smul.addr %s254, 8
        %s256 = scalar_lea.vmem %s0, %s255
        %p257 = pneg %p55
        %p258 = pneg %p52
        %p259 = pneg %p76
        %p260 = pneg %p73
        %p261 = scmp.lt.s32.totalorder %s25, 0
        %s262 = scalar_select %p261, %s25, 0
        %s263 = smul.addr %s262, 8
        %s264 = scalar_lea.vmem %s2, %s263
        %p265 = pneg %p102
        %p266 = pneg %p99
        %p267 = pneg %p123
        %p268 = pneg %p120
        %p269 = pneg %p144
        %p270 = pneg %p141
        %p271 = pneg %p165
        %p272 = pneg %p162
        %p273 = pneg %p191
        %p274 = pneg %p188
        %s275 = sand.u32 %s178, 1
        %s276 = scalar_lea.sflag [#allocation4], %s275
        %s277 = sand.u32 %s178, 1
        %s278 = smul.addr %s277, 16
        %s279 = scalar_lea.vmem [#allocation3], %s278
        %p280 = scmp.lt.s32.totalorder %s24, 1
        %s281 = scalar_select %p280, %s24, 1
        %p282 = scmp.lt.s32.totalorder %s25, 0
        %s283 = scalar_select %p282, %s25, 0
        %s284 = smul.addr %s283, 2
        %s285 = smul.addr %s281, 2
        %s286 = sadd.s32 %s284, %s285
        %s287 = smul.addr %s286, 8
        %s288 = scalar_lea.vmem %s0, %s287
        %p289 = scmp.lt.s32.totalorder %s25, 0
        %s290 = scalar_select %p289, %s25, 0
        %s291 = smul.addr %s290, 8
        %s292 = scalar_lea.vmem %s2, %s291
        %p293 = scmp.eq.s32.totalorder %s25, 0
        // Predicated region
        $region45: #{tpu_custom_call.1} parent=43 // pred_check
          %p294 = pneg %p293
        $region46: #{tpu_custom_call.1} parent=43 // pred_check_branch
          %296 = sbr.rel (%p294) target = $region48
        $region47: #{tpu_custom_call.1} parent=43 // pred_region
          %vm297 = vcmask 523264
          %298 = vst.msk [vmem:[#allocation2] sm:$0xff] %vm297, 0.0
        $region48: #{tpu_custom_call.1} parent=43 // pred_fallthru
          _
        %v299 = vld [vmem:[%s288] sm:$0xff]
        %v300 = vld [vmem:[%s288 + $0x8] sm:$0xff]
        %v301 = vld [vmem:[%s1] sm:$0xff]
        %v302 = vld [vmem:[%s1 + $0x8] sm:$0xff]
        %v303 = vld [vmem:[%s1 + $0x10] sm:$0xff]
        %v304 = vld [vmem:[%s1 + $0x18] sm:$0xff]
        %v305 = vld [vmem:[%s1 + $0x20] sm:$0xff]
        %v306 = vld [vmem:[%s1 + $0x28] sm:$0xff]
        %v307 = vld [vmem:[%s1 + $0x30] sm:$0xff]
        %v308 = vld [vmem:[%s1 + $0x38] sm:$0xff]
        %v309 = vld [vmem:[%s1 + $0x40] sm:$0xff]
        %v310 = vld [vmem:[%s1 + $0x48] sm:$0xff]
        %v311 = vld [vmem:[%s1 + $0x50] sm:$0xff]
        %v312 = vld [vmem:[%s1 + $0x58] sm:$0xff]
        %v313 = vld [vmem:[%s1 + $0x60] sm:$0xff]
        %v314 = vld [vmem:[%s1 + $0x68] sm:$0xff]
        %v315 = vld [vmem:[%s1 + $0x70] sm:$0xff]
        %v316 = vld [vmem:[%s1 + $0x78] sm:$0xff]
        %v317 = vld [vmem:[%s1 + $0x80] sm:$0xff]
        %v318 = vld [vmem:[%s1 + $0x88] sm:$0xff]
        %v319 = vld [vmem:[%s1 + $0x90] sm:$0xff]
        %v320 = vld [vmem:[%s1 + $0x98] sm:$0xff]
        %v321 = vld [vmem:[%s1 + $0xa0] sm:$0xff]
        %v322 = vld [vmem:[%s1 + $0xa8] sm:$0xff]
        %v323 = vld [vmem:[%s1 + $0xb0] sm:$0xff]
        %v324 = vld [vmem:[%s1 + $0xb8] sm:$0xff]
        %v325 = vld [vmem:[%s1 + $0xc0] sm:$0xff]
        %v326 = vld [vmem:[%s1 + $0xc8] sm:$0xff]
        %v327 = vld [vmem:[%s1 + $0xd0] sm:$0xff]
        %v328 = vld [vmem:[%s1 + $0xd8] sm:$0xff]
        %v329 = vld [vmem:[%s1 + $0xe0] sm:$0xff]
        %v330 = vld [vmem:[%s1 + $0xe8] sm:$0xff]
        %v331 = vld [vmem:[%s1 + $0xf0] sm:$0xff]
        %v332 = vld [vmem:[%s1 + $0xf8] sm:$0xff]
        %333 = vmatpush.msra.mxu0 %v316
        %334 = vmatpush.msra.mxu0 %v315
        %335 = vmatpush.msra.mxu0 %v314
        %336 = vmatpush.msra.mxu0 %v313
        %337 = vmatpush.msra.mxu0 %v312
        %338 = vmatpush.msra.mxu0 %v311
        %339 = vmatpush.msra.mxu0 %v310
        %340 = vmatpush.msra.mxu0 %v309
        %341 = vmatpush.msra.mxu0 %v308
        %342 = vmatpush.msra.mxu0 %v307
        %343 = vmatpush.msra.mxu0 %v306
        %344 = vmatpush.msra.mxu0 %v305
        %345 = vmatpush.msra.mxu0 %v304
        %346 = vmatpush.msra.mxu0 %v303
        %347 = vmatpush.msra.mxu0 %v302
        %348 = vmatpush.msra.mxu0 %v301
        %349 = vmatmul.f32.gmra.mxu0 %v299
        %v350 = vpop.f32.mrf.mxu0
        %v351 = vadd.f32 0.0, %v350
        %352 = vdwg.mxu0
        %353 = vmatpush.msra.mxu0 %v332
        %354 = vmatpush.msra.mxu0 %v331
        %355 = vmatpush.msra.mxu0 %v330
        %356 = vmatpush.msra.mxu0 %v329
        %357 = vmatpush.msra.mxu0 %v328
        %358 = vmatpush.msra.mxu0 %v327
        %359 = vmatpush.msra.mxu0 %v326
        %360 = vmatpush.msra.mxu0 %v325
        %361 = vmatpush.msra.mxu0 %v324
        %362 = vmatpush.msra.mxu0 %v323
        %363 = vmatpush.msra.mxu0 %v322
        %364 = vmatpush.msra.mxu0 %v321
        %365 = vmatpush.msra.mxu0 %v320
        %366 = vmatpush.msra.mxu0 %v319
        %367 = vmatpush.msra.mxu0 %v318
        %368 = vmatpush.msra.mxu0 %v317
        %369 = vmatmul.f32.gmra.mxu0 %v300
        %v370 = vpop.f32.mrf.mxu0
        %v371 = vadd.f32 %v351, %v370
        %372 = vdwg.mxu0
        %v373 = vld [vmem:[#allocation2] sm:$0xff]
        %v374 = vld [vmem:[%s292] sm:$0xff]
        %vm375 = vcmask 64512
        %v377 = vsel %vm375, %v374, 0
        %379 = vmatpush.msra.mxu0 0.0
        %380 = vmatpush.msra.mxu0 0.0
        %381 = vmatpush.msra.mxu0 0.0
        %382 = vmatpush.msra.mxu0 0.0
        %383 = vmatpush.msra.mxu0 0.0
        %384 = vmatpush.msra.mxu0 0.0
        %385 = vmatpush.msra.mxu0 0.0
        %386 = vmatpush.msra.mxu0 0.0
        %387 = vmatpush.msra.mxu0 0.0
        %388 = vmatpush.msra.mxu0 0.0
        %389 = vmatpush.msra.mxu0 0.0
        %390 = vmatpush.msra.mxu0 0.0
        %391 = vmatpush.msra.mxu0 0.0
        %392 = vmatpush.msra.mxu0 0.0
        %393 = vmatpush.msra.mxu0 0.0
        %394 = vmatpush.msra.mxu0 %v371
        %395 = vmatmul.f32.gmra.mxu0 %v377
        %v396 = vpop.f32.mrf.mxu0
        %v397 = vadd.f32 0.0, %v396
        %398 = vdwg.mxu0
        %v399 = vadd.f32 %v373, %v397
        %vm400 = vcmask 523264
        %401 = vst.msk [vmem:[#allocation2] sm:$0xff] %vm400, %v399
        // Predicated region
        $region49: #{tpu_custom_call.1} parent=43 // pred_check
          %p402 = pneg %p293
        $region50: #{tpu_custom_call.1} parent=43 // pred_check_branch
          %404 = sbr.rel (%p402) target = $region52
        $region51: #{tpu_custom_call.1} parent=43 // pred_region
          %v405 = vld [vmem:[#allocation2] sm:$0xff]
          %v406 = vld [vmem:[%s3] sm:$0xff]
          %408 = vset.pattern.permute.xlu0 0
          %409 = vperm.xlu0 %408, %v406
          %v410 = vpop.permute.xlu0 %409
          %v412 = vadd.f32 %v405, %v410
          %v413 = vmax.f32 %v412, 0.0
          %v414 = vld [vmem:[%s4] sm:$0xff]
          %v415 = vmul.f32 %v413, %v414
          %v416 = vld [vmem:[%s5] sm:$0xff]
          %v417 = vld [vmem:[%s5 + $0x8] sm:$0xff]
          %v418 = vld [vmem:[%s5 + $0x10] sm:$0xff]
          %v419 = vld [vmem:[%s5 + $0x18] sm:$0xff]
          %v420 = vld [vmem:[%s5 + $0x20] sm:$0xff]
          %v421 = vld [vmem:[%s5 + $0x28] sm:$0xff]
          %v422 = vld [vmem:[%s5 + $0x30] sm:$0xff]
          %v423 = vld [vmem:[%s5 + $0x38] sm:$0xff]
          %v424 = vld [vmem:[%s5 + $0x40] sm:$0xff]
          %v425 = vld [vmem:[%s5 + $0x48] sm:$0xff]
          %v426 = vld [vmem:[%s5 + $0x50] sm:$0xff]
          %v427 = vld [vmem:[%s5 + $0x58] sm:$0xff]
          %v428 = vld [vmem:[%s5 + $0x60] sm:$0xff]
          %v429 = vld [vmem:[%s5 + $0x68] sm:$0xff]
          %v430 = vld [vmem:[%s5 + $0x70] sm:$0xff]
          %v431 = vld [vmem:[%s5 + $0x78] sm:$0xff]
          %v433 = vsel %vm400, %v415, 0
          %435 = vmatpush.msra.mxu0 0.0
          %436 = vmatpush.msra.mxu0 0.0
          %437 = vmatpush.msra.mxu0 0.0
          %438 = vmatpush.msra.mxu0 0.0
          %439 = vmatpush.msra.mxu0 0.0
          %440 = vmatpush.msra.mxu0 0.0
          %441 = vmatpush.msra.mxu0 0.0
          %442 = vmatpush.msra.mxu0 0.0
          %443 = vmatpush.msra.mxu0 %v430
          %444 = vmatpush.msra.mxu0 %v428
          %445 = vmatpush.msra.mxu0 %v426
          %446 = vmatpush.msra.mxu0 %v424
          %447 = vmatpush.msra.mxu0 %v422
          %448 = vmatpush.msra.mxu0 %v420
          %449 = vmatpush.msra.mxu0 %v418
          %450 = vmatpush.msra.mxu0 %v416
          %451 = vmatmul.f32.gmra.mxu0 %v433
          %v452 = vpop.f32.mrf.mxu0
          %v453 = vadd.f32 0.0, %v452
          %454 = vdwg.mxu0
          %455 = vmatpush.msra.mxu0 0.0
          %456 = vmatpush.msra.mxu0 0.0
          %457 = vmatpush.msra.mxu0 0.0
          %458 = vmatpush.msra.mxu0 0.0
          %459 = vmatpush.msra.mxu0 0.0
          %460 = vmatpush.msra.mxu0 0.0
          %461 = vmatpush.msra.mxu0 0.0
          %462 = vmatpush.msra.mxu0 0.0
          %463 = vmatpush.msra.mxu0 %v431
          %464 = vmatpush.msra.mxu0 %v429
          %465 = vmatpush.msra.mxu0 %v427
          %466 = vmatpush.msra.mxu0 %v425
          %467 = vmatpush.msra.mxu0 %v423
          %468 = vmatpush.msra.mxu0 %v421
          %469 = vmatpush.msra.mxu0 %v419
          %470 = vmatpush.msra.mxu0 %v417
          %471 = vmatmul.f32.gmra.mxu0 %v433
          %v472 = vpop.f32.mrf.mxu0
          %v473 = vadd.f32 0.0, %v472
          %474 = vdwg.mxu0
          %475 = vst [vmem:[%s279] sm:$0xff] %v453
          %476 = vst [vmem:[%s279 + $0x8] sm:$0xff] %v473
        $region52: #{tpu_custom_call.1} parent=43 // pred_fallthru
          _
        %s477 = sand.u32 %s178, 1
        %s478 = scalar_lea.sflag [#allocation4], %s477
        %s479 = sand.u32 %s178, 1
        %s480 = smul.addr %s479, 16
        %s481 = scalar_lea.vmem [#allocation3], %s480
        // Predicated region
        $region53: #{tpu_custom_call.1} parent=43 // pred_check
          %p482 = pneg %p188
        $region54: #{tpu_custom_call.1} parent=43 // pred_check_branch
          %484 = sbr.rel (%p482) target = $region56
        $region55: #{tpu_custom_call.1} parent=43 // pred_region
          %486 = vsyncadd %s478, 0
          %s487 = smul.addr %s24, 2
          %s488 = smul.addr %s487, 8
          %s489 = scalar_lea.hbm %s6, %s488
          %s491 = sshll.u32 %s481, 4
          %s492 = int_to_ptr.vmem [resolvable:$true] %s491
          %s493 = sshll.u32 %s489, 4
          %s494 = int_to_ptr.hbm [resolvable:$true] %s493
          %496 = dma.vmem_to_hbm [thread:$0]  %s492, 256, %s494, %s478
        $region56: #{tpu_custom_call.1} parent=43 // pred_fallthru
          _
      $region44: #{tpu_custom_call.1} parent=5 // pred_fallthru
        _
      %p497 = scmp.le.s32.totalorder 2, %s15
      // Predicated region
      $region57: #{tpu_custom_call.1} parent=5 // pred_check
        %p498 = pneg %p497
      $region58: #{tpu_custom_call.1} parent=5 // pred_check_branch
        %500 = sbr.rel (%p498) target = $region60
      $region59: #{tpu_custom_call.1} parent=5 // pred_region
        %s501 = ssub.s32 %s15, 2
        // Predicated region
        $region61: #{tpu_custom_call.1} parent=59 // pred_check
          %p502 = pneg %p194
        $region62: #{tpu_custom_call.1} parent=59 // pred_check_branch
          %504 = sbr.rel (%p502) target = $region64
        $region63: #{tpu_custom_call.1} parent=59 // pred_region
          %s505 = sand.u32 %s179, 1
          %s506 = scalar_lea.sflag [#allocation4], %s505
          %s507 = sand.u32 %s179, 1
          %s508 = smul.addr %s507, 16
          %s509 = scalar_lea.vmem [#allocation3], %s508
          %511 = dma.done %s506, 256
        $region64: #{tpu_custom_call.1} parent=59 // pred_fallthru
          _
      $region60: #{tpu_custom_call.1} parent=5 // pred_fallthru
        _
    $region6: #{tpu_custom_call.1} parent=1 // loop_footer
      %s19 = sadd.s32 1, %s15
    $region7: #{tpu_custom_call.1} parent=1 // loop_footer_branch
      %14 = sbr.rel target = $region3
    $region8: #{tpu_custom_call.1} parent=1 // loop_exit
      _
    %512 = vsyncpa [#allocation4], 1
    %s513 = scalar_lea.sflag [#allocation4], 1
    %514 = vsyncpa %s513, 1

</llo_original>
